<compile_context>
chip_gen: v7x
topology: tpu7x:2x2x1
jax: 0.10.0
libtpu: 0.0.40
codegen_flags: <defaults>
</compile_context>

<pallas_src>
import jax
import jax.numpy as jnp
from jax.experimental import pallas as pl
from jax.experimental.pallas import tpu as pltpu

_LANE = 128
_SUBLANE = 8


def _round_up(n, m):
    return (n + m - 1) // m * m


def _cdiv(a, b):
    return -(-a // b)


def _mlp_kernel(xT_ref, w1_ref, b1_ref, w2_ref, b2_ref, oT_ref):
    xT = xT_ref[...]                      # (in_size, tb)   batch on lanes
    w1 = w1_ref[...]                      # (hidden_pad, in_size)
    in_size = xT.shape[0]

    # fc1: contraction dim is tiny (2) -> unrolled VPU outer-product FMAs.
    # xT[k:k+1, :] is a lane-dense row that broadcasts over the hidden
    # sublanes for free; the MXU would be pure fill/drain overhead here.
    h = w1[:, 0:1] * xT[0:1, :]
    for k in range(1, in_size):
        h = h + w1[:, k:k + 1] * xT[k:k + 1, :]
    h = jnp.maximum(h + b1_ref[...], 0.0)                 # (hidden_pad, tb)

    # fc2 on the MXU: (out, hidden_pad) @ (hidden_pad, tb), f32 accumulation,
    # N = tb lane-dense.  tanh on the EUP, cast only at the final store.
    y = jnp.dot(w2_ref[...], h, preferred_element_type=jnp.float32) + b2_ref[...]
    oT_ref[...] = jnp.tanh(y).astype(oT_ref.dtype)


def continuous_word_mlp_forward(x, w1, b1, w2, b2, *, batch_tile=2048,
                                out_dtype=None):
    """y = tanh(relu(x @ w1.T + b1) @ w2.T + b2).

    PyTorch nn.Linear layout:
      x : (..., input_size)
      w1: (hidden, input_size)    b1: (hidden,)
      w2: (output, hidden)        b2: (output,)
    """
    orig_shape = x.shape
    in_size = orig_shape[-1]
    hidden = w1.shape[0]
    out_size = w2.shape[0]
    out_dtype = x.dtype if out_dtype is None else out_dtype

    # ---- weight prep (hoist out of the hot path if the weights are static) --
    # Pad hidden to a sublane multiple with zero rows/cols: ReLU(0) = 0 and the
    # zero w2 columns contribute nothing, so the result is exact.
    hidden_pad = _round_up(hidden, _SUBLANE)
    w1p = jnp.pad(w1, ((0, hidden_pad - hidden), (0, 0)))
    b1p = jnp.pad(b1.reshape(-1), (0, hidden_pad - hidden)).reshape(hidden_pad, 1)
    w2p = jnp.pad(w2, ((0, 0), (0, hidden_pad - hidden)))
    b2p = b2.reshape(out_size, 1)

    # ---- batch tiling: batch rides the lane axis ----------------------------
    x2 = x.reshape(-1, in_size)
    B = x2.shape[0]

    lane_tiles = _cdiv(B, _LANE)                 # 128-row granules of batch
    n_grid = max(1, _cdiv(B, batch_tile))        # steps implied by the VMEM cap
    if n_grid == 1 and lane_tiles >= 2:
        n_grid = 2                               # keep both v7x TCs busy
    n_grid = min(n_grid, lane_tiles)
    tb = _cdiv(lane_tiles, n_grid) * _LANE       # balanced, lane-aligned tile
    b_pad = _cdiv(B, tb) * tb

    xT = x2.T                                    # (in_size, B): batch -> lanes
    if b_pad != B:
        xT = jnp.pad(xT, ((0, 0), (0, b_pad - B)))

    grid = (b_pad // tb,)

    yT = pl.pallas_call(
        _mlp_kernel,
        out_shape=jax.ShapeDtypeStruct((out_size, b_pad), out_dtype),
        grid_spec=pltpu.PrefetchScalarGridSpec(
            num_scalar_prefetch=0,
            grid=grid,
            in_specs=[
                pl.BlockSpec((in_size, tb), lambda i: (0, i)),          # x^T tile
                pl.BlockSpec((hidden_pad, in_size), lambda i: (0, 0)),  # w1 (resident)
                pl.BlockSpec((hidden_pad, 1), lambda i: (0, 0)),        # b1 (resident)
                pl.BlockSpec((out_size, hidden_pad), lambda i: (0, 0)), # w2 (resident)
                pl.BlockSpec((out_size, 1), lambda i: (0, 0)),          # b2 (resident)
            ],
            out_specs=pl.BlockSpec((out_size, tb), lambda i: (0, i)),   # y^T tile
        ),
        compiler_params=pltpu.CompilerParams(
            dimension_semantics=("parallel",),   # shard batch grid across v7x's 2 TCs
        ),
    )(xT, w1p, b1p, w2p, b2p)

    # Slice the batch padding and return to (..., out_size); this is a single
    # small XLA pass over the unpadded 32-feature output.
    y = yT[:, :B].T
    return y.reshape(*orig_shape[:-1], out_size)


def init_params(key, input_size, output_size, hidden=20):
    """Deterministic init mimicking nn.Linear (PyTorch weight layout)."""
    k1, k2, k3, k4 = jax.random.split(key, 4)
    bound1 = 1.0 / jnp.sqrt(jnp.float32(input_size))
    bound2 = 1.0 / jnp.sqrt(jnp.float32(hidden))
    w1 = jax.random.uniform(k1, (hidden, input_size), jnp.float32, -bound1, bound1)
    b1 = jax.random.uniform(k2, (hidden,), jnp.float32, -bound1, bound1)
    w2 = jax.random.uniform(k3, (output_size, hidden), jnp.float32, -bound2, bound2)
    b2 = jax.random.uniform(k4, (output_size,), jnp.float32, -bound2, bound2)
    return w1, b1, w2, b2


if __name__ == "__main__":
    key = jax.random.PRNGKey(0)
    k_x, k_x2, k_p = jax.random.split(key, 3)

    input_size = 2       # continuous_word_mlp is typically fed a (sin, cos) pair
    output_size = 32
    hidden = 20
    w1, b1, w2, b2 = init_params(k_p, input_size, output_size, hidden)

    def ref_fn(xx):
        return jnp.tanh(jnp.maximum(xx @ w1.T + b1, 0.0) @ w2.T + b2)

    # Small batch (single grid step).
    batch = 8
    x = jax.random.normal(k_x, (batch, input_size), jnp.float32)
    out = jax.block_until_ready(continuous_word_mlp_forward(x, w1, b1, w2, b2))
    assert out.shape == (batch, output_size)
    assert jnp.allclose(out, ref_fn(x), atol=1e-5, rtol=1e-5)

    # Larger ragged batch: exercises balanced lane tiles, padding, and a
    # multi-step "parallel" batch grid.
    batch2 = 333
    x2 = jax.random.normal(k_x2, (batch2, input_size), jnp.float32)
    out2 = jax.block_until_ready(continuous_word_mlp_forward(x2, w1, b1, w2, b2))
    assert out2.shape == (batch2, output_size)
    assert jnp.allclose(out2, ref_fn(x2), atol=1e-5, rtol=1e-5)

    print("KERNEL_OK")
</pallas_src>

<mosaic_0001>
module attributes {stable_mosaic.version = 11 : i64} {
  func.func @_mlp_kernel(%arg0: i32, %arg1: memref<2x128xf32, #tpu.memory_space<vmem>>, %arg2: memref<24x2xf32, #tpu.memory_space<vmem>>, %arg3: memref<24x1xf32, #tpu.memory_space<vmem>>, %arg4: memref<32x24xf32, #tpu.memory_space<vmem>>, %arg5: memref<32x1xf32, #tpu.memory_space<vmem>>, %arg6: memref<32x128xf32, #tpu.memory_space<vmem>>) attributes {dimension_semantics = [#tpu.dimension_semantics<parallel>], iteration_bounds = array<i64: 1>, scalar_prefetch = 0 : i64, scratch_operands = 0 : i64, tpu.core_type = #tpu.core_type<tc>, window_params = [{transform_indices = @transform_0, window_bounds = array<i64: 2, 128>}, {pipeline_mode = #tpu.pipeline_mode<synchronous>, transform_indices = @transform_1, window_bounds = array<i64: 24, 2>}, {pipeline_mode = #tpu.pipeline_mode<synchronous>, transform_indices = @transform_2, window_bounds = array<i64: 24, 1>}, {pipeline_mode = #tpu.pipeline_mode<synchronous>, transform_indices = @transform_3, window_bounds = array<i64: 32, 24>}, {pipeline_mode = #tpu.pipeline_mode<synchronous>, transform_indices = @transform_4, window_bounds = array<i64: 32, 1>}, {transform_indices = @transform_5, window_bounds = array<i64: 32, 128>}]} {
    %c0 = arith.constant 0 : index
    %c0_0 = arith.constant 0 : index
    %0 = vector.load %arg1[%c0, %c0_0] : memref<2x128xf32, #tpu.memory_space<vmem>>, vector<2x128xf32>
    %c0_1 = arith.constant 0 : index
    %c0_2 = arith.constant 0 : index
    %1 = vector.load %arg2[%c0_1, %c0_2] : memref<24x2xf32, #tpu.memory_space<vmem>>, vector<24x2xf32>
    %2 = vector.extract_strided_slice %1 {offsets = [0, 0], sizes = [24, 1], strides = [1, 1]} : vector<24x2xf32> to vector<24x1xf32>
    %3 = vector.extract_strided_slice %0 {offsets = [0, 0], sizes = [1, 128], strides = [1, 1]} : vector<2x128xf32> to vector<1x128xf32>
    %4 = vector.broadcast %2 : vector<24x1xf32> to vector<24x128xf32>
    %5 = vector.broadcast %3 : vector<1x128xf32> to vector<24x128xf32>
    %6 = arith.mulf %4, %5 : vector<24x128xf32>
    %7 = vector.extract_strided_slice %1 {offsets = [0, 1], sizes = [24, 1], strides = [1, 1]} : vector<24x2xf32> to vector<24x1xf32>
    %8 = vector.extract_strided_slice %0 {offsets = [1, 0], sizes = [1, 128], strides = [1, 1]} : vector<2x128xf32> to vector<1x128xf32>
    %9 = vector.broadcast %7 : vector<24x1xf32> to vector<24x128xf32>
    %10 = vector.broadcast %8 : vector<1x128xf32> to vector<24x128xf32>
    %11 = arith.mulf %9, %10 : vector<24x128xf32>
    %12 = arith.addf %6, %11 : vector<24x128xf32>
    %c0_3 = arith.constant 0 : index
    %c0_4 = arith.constant 0 : index
    %13 = vector.load %arg3[%c0_3, %c0_4] : memref<24x1xf32, #tpu.memory_space<vmem>>, vector<24x1xf32>
    %14 = vector.broadcast %13 : vector<24x1xf32> to vector<24x128xf32>
    %15 = arith.addf %12, %14 : vector<24x128xf32>
    %cst = arith.constant 0.000000e+00 : f32
    %16 = vector.broadcast %cst : f32 to vector<24x128xf32>
    %17 = arith.maximumf %15, %16 : vector<24x128xf32>
    %c0_5 = arith.constant 0 : index
    %c0_6 = arith.constant 0 : index
    %18 = vector.load %arg4[%c0_5, %c0_6] : memref<32x24xf32, #tpu.memory_space<vmem>>, vector<32x24xf32>
    %cst_7 = arith.constant dense<0.000000e+00> : vector<32x128xf32>
    %19 = tpu.matmul %18, %17, %cst_7 {dimension_numbers = #tpu.dot_dimension_numbers<[1], [0], [0], [1], [0, 0, 1, 1], [], []>} : vector<32x24xf32>, vector<24x128xf32>, vector<32x128xf32> -> vector<32x128xf32>
    %c0_8 = arith.constant 0 : index
    %c0_9 = arith.constant 0 : index
    %20 = vector.load %arg5[%c0_8, %c0_9] : memref<32x1xf32, #tpu.memory_space<vmem>>, vector<32x1xf32>
    %21 = vector.broadcast %20 : vector<32x1xf32> to vector<32x128xf32>
    %22 = arith.addf %19, %21 : vector<32x128xf32>
    %23 = math.tanh %22 : vector<32x128xf32>
    %c0_10 = arith.constant 0 : index
    %c0_11 = arith.constant 0 : index
    %24 = vector.load %arg6[%c0_10, %c0_11] : memref<32x128xf32, #tpu.memory_space<vmem>>, vector<32x128xf32>
    tpu.vector_store %arg6[%c0_10, %c0_11], %23 {strides = array<i32>} : memref<32x128xf32, #tpu.memory_space<vmem>>, vector<32x128xf32>,
    return
  }
  func.func @transform_0(%arg0: i32) -> (i32, i32) {
    %c0_i32 = arith.constant 0 : i32
    %c0_i32_0 = arith.constant 0 : i32
    return %c0_i32, %arg0 : i32, i32
  }
  func.func @transform_1(%arg0: i32) -> (i32, i32) {
    %c0_i32 = arith.constant 0 : i32
    %c0_i32_0 = arith.constant 0 : i32
    %c0_i32_1 = arith.constant 0 : i32
    return %c0_i32, %c0_i32_0 : i32, i32
  }
  func.func @transform_2(%arg0: i32) -> (i32, i32) {
    %c0_i32 = arith.constant 0 : i32
    %c0_i32_0 = arith.constant 0 : i32
    %c0_i32_1 = arith.constant 0 : i32
    return %c0_i32, %c0_i32_0 : i32, i32
  }
  func.func @transform_3(%arg0: i32) -> (i32, i32) {
    %c0_i32 = arith.constant 0 : i32
    %c0_i32_0 = arith.constant 0 : i32
    %c0_i32_1 = arith.constant 0 : i32
    return %c0_i32, %c0_i32_0 : i32, i32
  }
  func.func @transform_4(%arg0: i32) -> (i32, i32) {
    %c0_i32 = arith.constant 0 : i32
    %c0_i32_0 = arith.constant 0 : i32
    %c0_i32_1 = arith.constant 0 : i32
    return %c0_i32, %c0_i32_0 : i32, i32
  }
  func.func @transform_5(%arg0: i32) -> (i32, i32) {
    %c0_i32 = arith.constant 0 : i32
    %c0_i32_0 = arith.constant 0 : i32
    return %c0_i32, %arg0 : i32, i32
  }
}

</mosaic_0001>

<llo_original>
// kernel: tpu_custom_call.1
$region0: #{tpu_custom_call.1}
  #allocation0 [shape = 'u32[]', space=smem, size = 0x4, offset = 0x4, fixed_abs, tag = 'smem constant byte address 0x4 - core index']
  #allocation1 [shape = 'u32[144,128]{1,0:T(1,128)}', space=vmem, size = 0x12000, scoped, tag = 'internal scratch']
  %s0 = inlined_call_operand.vmem [shape: f32[2,128], index: 0, kind: input, shape index: {}]
  %s1 = inlined_call_operand.vmem [shape: f32[24,2], index: 1, kind: input, shape index: {}]
  %s2 = inlined_call_operand.vmem [shape: f32[24,1], index: 2, kind: input, shape index: {}]
  %s3 = inlined_call_operand.vmem [shape: f32[32,24], index: 3, kind: input, shape index: {}]
  %s4 = inlined_call_operand.vmem [shape: f32[32,1], index: 4, kind: input, shape index: {}]
  %s5 = inlined_call_operand.hbm [shape: f32[32,128], index: 5, kind: output, shape index: {}]
  %s6 = sld [smem:[#allocation0]]
  $region30: #{tpu_custom_call.1} parent=0
    _
  %s8 = ssub.s32 1, %s6
  %s9 = scalar_select 0, %s8, %s6
  $region1: #{tpu_custom_call.1} parent=0
    #allocation2 [shape = 'u8[16384]{0}', space=vmem, size = 0x4000, scoped, tag = 'output window, operand 0, single buffered']
    #allocation3 [shape = 's32[1]{0}', space=sflag, size = 0x4, scoped, tag = 'scoped memory for tpu_custom_call.1']
    %10 = vsyncpa [#allocation3], 0
    // Predicated region
    $region2: #{tpu_custom_call.1} parent=1 // pred_check
      _
    $region3: #{tpu_custom_call.1} parent=1 // pred_check_branch
      %12 = sbr.rel (0) target = $region5
    $region4: #{tpu_custom_call.1} parent=1 // pred_region
      _
    $region5: #{tpu_custom_call.1} parent=1 // pred_fallthru
      _
    // Predicated region
    $region6: #{tpu_custom_call.1} parent=1 // pred_check
      _
    $region7: #{tpu_custom_call.1} parent=1 // pred_check_branch
      %14 = sbr.rel (0) target = $region9
    $region8: #{tpu_custom_call.1} parent=1 // pred_region
      _
    $region9: #{tpu_custom_call.1} parent=1 // pred_fallthru
      _
    // Predicated region
    $region10: #{tpu_custom_call.1} parent=1 // pred_check
      _
    $region11: #{tpu_custom_call.1} parent=1 // pred_check_branch
      %16 = sbr.rel (0) target = $region13
    $region12: #{tpu_custom_call.1} parent=1 // pred_region
      _
    $region13: #{tpu_custom_call.1} parent=1 // pred_fallthru
      _
    // Predicated region
    $region14: #{tpu_custom_call.1} parent=1 // pred_check
      _
    $region15: #{tpu_custom_call.1} parent=1 // pred_check_branch
      %18 = sbr.rel (0) target = $region17
    $region16: #{tpu_custom_call.1} parent=1 // pred_region
      _
    $region17: #{tpu_custom_call.1} parent=1 // pred_fallthru
      _
    // Predicated region
    $region18: #{tpu_custom_call.1} parent=1 // pred_check
      _
    $region19: #{tpu_custom_call.1} parent=1 // pred_check_branch
      %20 = sbr.rel (0) target = $region21
    $region20: #{tpu_custom_call.1} parent=1 // pred_region
      _
    $region21: #{tpu_custom_call.1} parent=1 // pred_fallthru
      _
    %v21 = vld [vmem:[%s0] sm:$0x3]
    %v22 = vld [vmem:[%s1] sm:$0xff]
    %v23 = vld [vmem:[%s1 + $0x8] sm:$0xff]
    %v24 = vld [vmem:[%s1 + $0x10] sm:$0xff]
    %26 = vset.pattern.permute.xlu0 0
    %27 = vperm.xlu0 %26, %v22
    %v28 = vpop.permute.xlu0 %27
    %31 = vset.pattern.permute.xlu0 0
    %32 = vperm.xlu0 %31, %v23
    %v33 = vpop.permute.xlu0 %32
    %36 = vset.pattern.permute.xlu0 0
    %37 = vperm.xlu0 %36, %v24
    %v38 = vpop.permute.xlu0 %37
    %v40 = vlaneseq
    %v41 = vshrl.u32 %v40, 7
    %v42 = vsub.s32 0, %v41
    %v43 = vrot.slane %v21, %v42
    %v44 = vmul.f32 %v28, %v43
    %v45 = vmul.f32 %v33, %v43
    %v46 = vmul.f32 %v38, %v43
    %47 = vset.pattern.permute.xlu0 1
    %48 = vperm.xlu0 %47, %v22
    %v49 = vpop.permute.xlu0 %48
    %51 = vset.pattern.permute.xlu0 1
    %52 = vperm.xlu0 %51, %v23
    %v53 = vpop.permute.xlu0 %52
    %55 = vset.pattern.permute.xlu0 1
    %56 = vperm.xlu0 %55, %v24
    %v57 = vpop.permute.xlu0 %56
    %v59 = vlaneseq
    %v60 = vshrl.u32 %v59, 7
    %v61 = vsub.s32 1, %v60
    %v62 = vrot.slane %v21, %v61
    %v63 = vmul.f32 %v49, %v62
    %v64 = vmul.f32 %v53, %v62
    %v65 = vmul.f32 %v57, %v62
    %v66 = vadd.f32 %v44, %v63
    %v67 = vadd.f32 %v45, %v64
    %v68 = vadd.f32 %v46, %v65
    %v69 = vld [vmem:[%s2] sm:$0xff]
    %v70 = vld [vmem:[%s2 + $0x8] sm:$0xff]
    %v71 = vld [vmem:[%s2 + $0x10] sm:$0xff]
    %73 = vset.pattern.permute.xlu0 0
    %74 = vperm.xlu0 %73, %v69
    %v75 = vpop.permute.xlu0 %74
    %78 = vset.pattern.permute.xlu0 0
    %79 = vperm.xlu0 %78, %v70
    %v80 = vpop.permute.xlu0 %79
    %83 = vset.pattern.permute.xlu0 0
    %84 = vperm.xlu0 %83, %v71
    %v85 = vpop.permute.xlu0 %84
    %v87 = vadd.f32 %v66, %v75
    %v88 = vadd.f32 %v67, %v80
    %v89 = vadd.f32 %v68, %v85
    %v90 = vmax.f32 %v87, 0.0
    %v91 = vmax.f32 %v88, 0.0
    %v92 = vmax.f32 %v89, 0.0
    %v93 = vld [vmem:[%s3] sm:$0xff]
    %v94 = vld [vmem:[%s3 + $0x8] sm:$0xff]
    %v95 = vld [vmem:[%s3 + $0x10] sm:$0xff]
    %v96 = vld [vmem:[%s3 + $0x18] sm:$0xff]
    %v97 = vld [vmem:[%s4] sm:$0xff]
    %v98 = vld [vmem:[%s4 + $0x8] sm:$0xff]
    %v99 = vld [vmem:[%s4 + $0x10] sm:$0xff]
    %v100 = vld [vmem:[%s4 + $0x18] sm:$0xff]
    %102 = vset.pattern.permute.xlu0 0
    %103 = vperm.xlu0 %102, %v97
    %v104 = vpop.permute.xlu0 %103
    %107 = vset.pattern.permute.xlu0 0
    %108 = vperm.xlu0 %107, %v98
    %v109 = vpop.permute.xlu0 %108
    %112 = vset.pattern.permute.xlu0 0
    %113 = vperm.xlu0 %112, %v99
    %v114 = vpop.permute.xlu0 %113
    %117 = vset.pattern.permute.xlu0 0
    %118 = vperm.xlu0 %117, %v100
    %v119 = vpop.permute.xlu0 %118
    %vm121 = vcmask 195584
    %v123 = vsel %vm121, %v93, 0
    %v126 = vsel %vm121, %v94, 0
    %v129 = vsel %vm121, %v95, 0
    %v132 = vsel %vm121, %v96, 0
    %134 = vmatprep.subr.mxu0 0.0
    %135 = vmatpush1.msra.mxu0 %v90
    %136 = vmatprep.subr.mxu0 0.0
    %137 = vmatpush1.msra.mxu0 %v91
    %138 = vmatprep.subr.mxu0 0.0
    %139 = vmatpush1.msra.mxu0 %v92
    %140 = vmatprep.subr.mxu0 0.0
    %141 = vmatpush1.msra.mxu0 0.0
    %142 = vmatprep.subr.mxu0 0.0
    %143 = vmatpush1.msra.mxu0 0.0
    %144 = vmatprep.subr.mxu0 0.0
    %145 = vmatpush1.msra.mxu0 0.0
    %146 = vmatprep.subr.mxu0 0.0
    %147 = vmatpush1.msra.mxu0 0.0
    %148 = vmatprep.subr.mxu0 0.0
    %149 = vmatpush1.msra.mxu0 0.0
    %150 = vmatprep.subr.mxu0 0.0
    %151 = vmatpush1.msra.mxu0 0.0
    %152 = vmatprep.subr.mxu0 0.0
    %153 = vmatpush1.msra.mxu0 0.0
    %154 = vmatprep.subr.mxu0 0.0
    %155 = vmatpush1.msra.mxu0 0.0
    %156 = vmatprep.subr.mxu0 0.0
    %157 = vmatpush1.msra.mxu0 0.0
    %158 = vmatprep.subr.mxu0 0.0
    %159 = vmatpush1.msra.mxu0 0.0
    %160 = vmatprep.subr.mxu0 0.0
    %161 = vmatpush1.msra.mxu0 0.0
    %162 = vmatprep.subr.mxu0 0.0
    %163 = vmatpush1.msra.mxu0 0.0
    %164 = vmatprep.subr.mxu0 0.0
    %165 = vmatpush1.msra.mxu0 0.0
    %166 = vmatprep.subr.mxu0 0.0
    %167 = vmatpush1.msra.mxu0 0.0
    %168 = vmatprep.subr.mxu0 0.0
    %169 = vmatpush1.msra.mxu0 0.0
    %170 = vmatprep.subr.mxu0 0.0
    %171 = vmatpush1.msra.mxu0 0.0
    %172 = vmatprep.subr.mxu0 0.0
    %173 = vmatpush1.msra.mxu0 0.0
    %174 = vmatprep.subr.mxu0 0.0
    %175 = vmatpush1.msra.mxu0 0.0
    %176 = vmatprep.subr.mxu0 0.0
    %177 = vmatpush1.msra.mxu0 0.0
    %178 = vmatprep.subr.mxu0 0.0
    %179 = vmatpush1.msra.mxu0 0.0
    %180 = vmatprep.subr.mxu0 0.0
    %181 = vmatpush1.msra.mxu0 0.0
    %182 = vmatprep.subr.mxu0 0.0
    %183 = vmatpush1.msra.mxu0 0.0
    %184 = vmatprep.subr.mxu0 0.0
    %185 = vmatpush1.msra.mxu0 0.0
    %186 = vmatprep.subr.mxu0 0.0
    %187 = vmatpush1.msra.mxu0 0.0
    %188 = vmatprep.subr.mxu0 0.0
    %189 = vmatpush1.msra.mxu0 0.0
    %190 = vmatprep.subr.mxu0 0.0
    %191 = vmatpush1.msra.mxu0 0.0
    %192 = vmatprep.subr.mxu0 0.0
    %193 = vmatpush1.msra.mxu0 0.0
    %194 = vmatprep.subr.mxu0 0.0
    %195 = vmatpush1.msra.mxu0 0.0
    %196 = vmatprep.subr.mxu0 0.0
    %197 = vmatpush1.msra.mxu0 0.0
    %198 = vmatprep.mubr.f32.mxu0 0.0
    %199 = vmatmul.mubr.f32.gmra.mrb[0].mxu0 %v123
    %v200 = vpop.f32.mrb[0].mxu0
    %v201 = vadd.f32 %v104, %v200
    %v202 = vpop.f32.mrb[0].mxu0
    %203 = vmatprep.mubr.f32.mxu0 0.0
    %204 = vmatmul.mubr.f32.gmra.mrb[0].mxu0 %v126
    %v205 = vpop.f32.mrb[0].mxu0
    %v206 = vadd.f32 %v109, %v205
    %v207 = vpop.f32.mrb[0].mxu0
    %208 = vmatprep.mubr.f32.mxu0 0.0
    %209 = vmatmul.mubr.f32.gmra.mrb[0].mxu0 %v129
    %v210 = vpop.f32.mrb[0].mxu0
    %v211 = vadd.f32 %v114, %v210
    %v212 = vpop.f32.mrb[0].mxu0
    %213 = vmatprep.mubr.f32.mxu0 0.0
    %214 = vmatmul.mubr.f32.gmra.mrb[0].mxu0 %v132
    %v215 = vpop.f32.mrb[0].mxu0
    %v216 = vadd.f32 %v119, %v215
    %v217 = vpop.f32.mrb[0].mxu0
    %218 = vdwg.mxu0
    %v219 = vtanh.pop %v201
    %v220 = vtanh.pop %v206
    %v221 = vtanh.pop %v211
    %v222 = vtanh.pop %v216
    %223 = vst [vmem:[#allocation2] sm:$0xff] %v219
    %224 = vst [vmem:[#allocation2 + $0x8] sm:$0xff] %v220
    %225 = vst [vmem:[#allocation2 + $0x10] sm:$0xff] %v221
    %226 = vst [vmem:[#allocation2 + $0x18] sm:$0xff] %v222
    // Predicated region
    $region22: #{tpu_custom_call.1} parent=1 // pred_check
      _
    $region23: #{tpu_custom_call.1} parent=1 // pred_check_branch
      %228 = sbr.rel (0) target = $region25
    $region24: #{tpu_custom_call.1} parent=1 // pred_region
      %s230 = ssub.s32 512, 512
      %231 = vsyncadd [#allocation3], %s230
      %s232 = sshll.u32 [#allocation2], 4
      %s233 = int_to_ptr.vmem [resolvable:$true] %s232
      %238 = dma.vmem_to_hbm [thread:$0]  %s233, 512, %s5, [#allocation3], 128, 128, 8
    $region25: #{tpu_custom_call.1} parent=1 // pred_fallthru
      _
    // Predicated region
    $region26: #{tpu_custom_call.1} parent=1 // pred_check
      _
    $region27: #{tpu_custom_call.1} parent=1 // pred_check_branch
      %240 = sbr.rel (0) target = $region29
    $region28: #{tpu_custom_call.1} parent=1 // pred_region
      %241 = dma.done [#allocation3], 512
    $region29: #{tpu_custom_call.1} parent=1 // pred_fallthru
      _
    %242 = vsyncpa [#allocation3], 1

</llo_original>
